<compile_context>
chip_gen: v7x
topology: tpu7x:2x2x1
jax: 0.10.0
libtpu: 0.0.40
codegen_flags: <defaults>
</compile_context>

<pallas_src>
import jax
import jax.numpy as jnp
from jax.experimental import pallas as pl
from jax.experimental.pallas import tpu as pltpu


# ---------------------------------------------------------------------------
# Chip detection: only v7x has 2 TensorCores per chip; default to the safe 1.
# ---------------------------------------------------------------------------
def _num_tensorcores():
    try:
        kind = (getattr(jax.devices()[0], "device_kind", "") or "").lower()
        if "v7" in kind or "7x" in kind:
            return 2
    except Exception:
        pass
    return 1


# ---------------------------------------------------------------------------
# Kernel: per-core lane-dense partial sums of BCE-with-logits.
# Accumulates into a resident (1, NC, 128) output block per core.
# ---------------------------------------------------------------------------
def _make_bce_sum_kernel(nc, tile_p, n_inner, chunk, n_chunks, hw_valid, need_mask):
    n_fold = chunk // 128

    def kernel(pred_ref, tgt_ref, out_ref):
        # zero the resident per-core accumulator at the start of its sweep
        @pl.when(pl.program_id(1) == 0)
        def _():
            out_ref[...] = jnp.zeros_like(out_ref)

        tile_base = (pl.program_id(0) * n_inner + pl.program_id(1)) * tile_p
        if need_mask:
            lane = jax.lax.broadcasted_iota(jnp.int32, (nc, chunk), 1)

        def chunk_partial(start):
            # numerically stable BCE-with-logits: 1 exp + 1 log1p per element (EUP)
            x = pred_ref[:, pl.ds(start, chunk)].astype(jnp.float32)
            z = tgt_ref[:, pl.ds(start, chunk)].astype(jnp.float32)
            e = jnp.exp(-jnp.abs(x))
            bce = jnp.maximum(x, 0.0) - x * z + jnp.log1p(e)
            if need_mask:
                # zero contributions from lanes past the true H*W extent
                bce = jnp.where(tile_base + start + lane < hw_valid, bce, 0.0)
            # fold the chunk into 128-wide lane partial sums (aligned VPU adds)
            part = bce[:, 0:128]
            for h in range(1, n_fold):
                part = part + bce[:, h * 128:(h + 1) * 128]
            return part

        if n_chunks <= 8:
            acc = chunk_partial(0)
            for g in range(1, n_chunks):
                acc = acc + chunk_partial(g * chunk)
        else:
            def body(g, acc):
                start = pl.multiple_of(g * chunk, 128)
                return acc + chunk_partial(start)
            acc = jax.lax.fori_loop(0, n_chunks, body,
                                    jnp.zeros((nc, 128), jnp.float32), unroll=4)

        out_ref[...] += acc[None, :, :]

    return kernel


# ---------------------------------------------------------------------------
# Wrapper
# ---------------------------------------------------------------------------
def mask_binary_cross_entropy(pred, target, mask, *, weight=None, reduction="none"):
    """pred/target: (N, C, H, W); mask: (N, H, W); weight: optional per-class (C,)."""
    N, C, H, W = pred.shape
    NC, HW = N * C, H * W
    total = N * C * H * W

    # (N, C, H, W) -> (N*C, H*W): contiguous reshape; no pad, no transpose, no cast.
    pred2 = pred.reshape(NC, HW)
    tgt2 = target.reshape(NC, HW)

    # ---- tiling: lane chunk bounded by vreg pressure, tile bounded by bytes ----
    hw128 = pl.cdiv(HW, 128) * 128
    chunk = max(128, (8192 // NC) // 128 * 128)          # ~<=32 KiB f32 intermediates
    chunk = min(chunk, hw128)
    itemsize = max(jnp.dtype(pred.dtype).itemsize, jnp.dtype(target.dtype).itemsize)
    tp_target = (4 * 1024 * 1024) // (NC * itemsize)     # ~4 MiB per input block
    tp = max(chunk, (tp_target // chunk) * chunk)        # multiple of chunk (and 128)
    tp = min(tp, pl.cdiv(HW, chunk) * chunk)             # never exceed the row extent
    n_chunks = tp // chunk

    n_tiles = pl.cdiv(HW, tp)
    n_cores = min(_num_tensorcores(), n_tiles)           # 2-way split only on v7x
    n_inner = pl.cdiv(n_tiles, n_cores)
    grid_tiles = n_cores * n_inner
    need_mask = grid_tiles * tp != HW                    # any lane past HW must be zeroed
    clamp = grid_tiles > n_tiles                         # odd-tile overhang on 2-core split
    last_block = n_tiles - 1

    def lane_block(c, j):
        t = c * n_inner + j
        return jnp.minimum(t, last_block) if clamp else t

    kernel = _make_bce_sum_kernel(NC, tp, n_inner, chunk, n_chunks, HW, need_mask)

    block_bytes = NC * tp * itemsize
    vmem_limit = min(48 * 1024 * 1024, max(32 * 1024 * 1024, 5 * block_bytes))

    partials = pl.pallas_call(
        kernel,
        out_shape=jax.ShapeDtypeStruct((n_cores, NC, 128), jnp.float32),
        grid_spec=pltpu.PrefetchScalarGridSpec(
            num_scalar_prefetch=0,
            grid=(n_cores, n_inner),
            in_specs=[
                pl.BlockSpec((NC, tp), lambda c, j: (0, lane_block(c, j))),
                pl.BlockSpec((NC, tp), lambda c, j: (0, lane_block(c, j))),
            ],
            out_specs=pl.BlockSpec((1, NC, 128), lambda c, j: (c, 0, 0)),
        ),
        compiler_params=pltpu.CompilerParams(
            dimension_semantics=("parallel", "arbitrary"),
            vmem_limit_bytes=vmem_limit),
    )(pred2, tgt2)

    # tiny final reduce (n_cores * NC * 128 floats), class weights applied here:
    # sum_lanes(w * bce) == w * sum_lanes(bce), so the hot loop never sees them.
    row_sums = jnp.sum(partials, axis=(0, 2))                        # (NC,)
    if weight is not None:
        w = jnp.asarray(weight, jnp.float32).reshape(-1)             # per-channel (C,)
        row_sums = row_sums * jnp.tile(w, N)
    bce_mean = jnp.sum(row_sums) / total      # F.bce_with_logits default reduction='mean'

    if reduction != "none":
        # loss.sum(dim=1).mean() with loss = mask[:,None] * scalar == scalar * mask.mean()
        return bce_mean * jnp.mean(mask.astype(jnp.float32))

    # reduction='none': trivial broadcast; XLA fuses this at full HBM bandwidth.
    return mask.astype(jnp.float32)[:, None, :, :] * bce_mean


class MaskBinaryCrossEntropy:
    """Functional analogue of the PyTorch module."""

    def __init__(self, weight=None, reduction="none"):
        # PyTorch module reshapes weight to (1, C, 1, 1): per-channel semantics.
        self.weight = None if weight is None else jnp.asarray(weight, jnp.float32).reshape(-1)
        self.reduction = reduction

    def __call__(self, pred, target, mask):
        return mask_binary_cross_entropy(pred, target, mask,
                                         weight=self.weight, reduction=self.reduction)


# ---------------------------------------------------------------------------
# Pure-JAX reference (mirrors the PyTorch forward literally), for verification.
# ---------------------------------------------------------------------------
def _reference(pred, target, mask, weight=None, reduction="none"):
    x = pred.astype(jnp.float32)
    z = target.astype(jnp.float32)
    bce = jnp.maximum(x, 0.0) - x * z + jnp.log1p(jnp.exp(-jnp.abs(x)))
    if weight is not None:
        bce = bce * jnp.asarray(weight, jnp.float32).reshape(1, -1, 1, 1)
    bce_mean = jnp.mean(bce)                       # default reduction='mean' inside F.*
    loss = mask.astype(jnp.float32)[:, None, :, :] * bce_mean
    if reduction == "none":
        return loss
    return loss.sum(axis=1).mean()


if __name__ == "__main__":
    key = jax.random.PRNGKey(0)
    k1, k2, k3 = jax.random.split(key, 3)

    N, C, H, W = 2, 4, 16, 16
    pred = jax.random.normal(k1, (N, C, H, W), dtype=jnp.float32)
    target = (jax.random.uniform(k2, (N, C, H, W)) > 0.5).astype(jnp.float32)
    mask = (jax.random.uniform(k3, (N, H, W)) > 0.3).astype(jnp.float32)

    # default module: weight=None, reduction='none'  ->  (N, 1, H, W)
    out = jax.block_until_ready(MaskBinaryCrossEntropy()(pred, target, mask))
    ref = jax.block_until_ready(_reference(pred, target, mask))
    assert out.shape == (N, 1, H, W), out.shape
    assert bool(jnp.all(jnp.isfinite(out))), "non-finite output"
    assert jnp.allclose(out, ref, rtol=1e-5, atol=1e-6), (
        float(out.ravel()[0]), float(ref.ravel()[0]))

    # boundary-masked path (H*W not a multiple of 128) with per-class weights
    H2, W2 = 10, 10
    pred_b = jax.random.normal(k1, (N, C, H2, W2), dtype=jnp.float32)
    target_b = (jax.random.uniform(k2, (N, C, H2, W2)) > 0.5).astype(jnp.float32)
    mask_b = (jax.random.uniform(k3, (N, H2, W2)) > 0.3).astype(jnp.float32)
    wgt = jnp.asarray([0.5, 1.0, 2.0, 1.5], jnp.float32)
    out_b = jax.block_until_ready(
        mask_binary_cross_entropy(pred_b, target_b, mask_b, weight=wgt))
    ref_b = jax.block_until_ready(_reference(pred_b, target_b, mask_b, weight=wgt))
    assert jnp.allclose(out_b, ref_b, rtol=1e-5, atol=1e-6)

    # reduced path: loss.sum(dim=1).mean()  (reuses the same compiled Pallas pass)
    out_r = jax.block_until_ready(
        mask_binary_cross_entropy(pred, target, mask, reduction="mean"))
    ref_r = jax.block_until_ready(_reference(pred, target, mask, reduction="mean"))
    assert jnp.allclose(out_r, ref_r, rtol=1e-5, atol=1e-6)

    print("KERNEL_OK")
</pallas_src>

<mosaic_0001>
module attributes {stable_mosaic.version = 11 : i64} {
  func.func @kernel(%arg0: i32, %arg1: i32, %arg2: memref<8x256xf32, #tpu.memory_space<vmem>>, %arg3: memref<8x256xf32, #tpu.memory_space<vmem>>, %arg4: memref<1x8x128xf32, #tpu.memory_space<vmem>>) attributes {dimension_semantics = [#tpu.dimension_semantics<parallel>, #tpu.dimension_semantics<arbitrary>], iteration_bounds = array<i64: 1, 1>, scalar_prefetch = 0 : i64, scratch_operands = 0 : i64, tpu.core_type = #tpu.core_type<tc>, window_params = [{transform_indices = @transform_0, window_bounds = array<i64: 8, 256>}, {transform_indices = @transform_1, window_bounds = array<i64: 8, 256>}, {transform_indices = @transform_2, window_bounds = array<i64: 1, 8, 128>}]} {
    %c0_i32 = arith.constant 0 : i32
    %0 = arith.cmpi eq, %arg1, %c0_i32 : i32
    %1 = arith.extui %0 : i1 to i32
    %c0_i32_0 = arith.constant 0 : i32
    %2 = arith.cmpi ne, %1, %c0_i32_0 : i32
    scf.if %2 {
      %cst_11 = arith.constant 0.000000e+00 : f32
      %22 = vector.broadcast %cst_11 : f32 to vector<1x8x128xf32>
      %c0_12 = arith.constant 0 : index
      %c0_13 = arith.constant 0 : index
      %c0_14 = arith.constant 0 : index
      %23 = vector.load %arg4[%c0_12, %c0_13, %c0_14] : memref<1x8x128xf32, #tpu.memory_space<vmem>>, vector<1x8x128xf32>
      tpu.vector_store %arg4[%c0_12, %c0_13, %c0_14], %22 {strides = array<i32>} : memref<1x8x128xf32, #tpu.memory_space<vmem>>, vector<1x8x128xf32>,
    } else {
    }
    %c0 = arith.constant 0 : index
    %c0_1 = arith.constant 0 : index
    %3 = vector.load %arg2[%c0, %c0_1] : memref<8x256xf32, #tpu.memory_space<vmem>>, vector<8x256xf32>
    %c0_2 = arith.constant 0 : index
    %c0_3 = arith.constant 0 : index
    %4 = vector.load %arg3[%c0_2, %c0_3] : memref<8x256xf32, #tpu.memory_space<vmem>>, vector<8x256xf32>
    %5 = math.absf %3 : vector<8x256xf32>
    %cst = arith.constant 0.000000e+00 : f32
    %6 = vector.broadcast %cst : f32 to vector<8x256xf32>
    %7 = arith.subf %6, %5 : vector<8x256xf32>
    %8 = math.exp %7 : vector<8x256xf32>
    %cst_4 = arith.constant 0.000000e+00 : f32
    %9 = vector.broadcast %cst_4 : f32 to vector<8x256xf32>
    %10 = arith.maximumf %3, %9 : vector<8x256xf32>
    %11 = arith.mulf %3, %4 : vector<8x256xf32>
    %12 = arith.subf %10, %11 : vector<8x256xf32>
    %13 = math.log1p %8 : vector<8x256xf32>
    %14 = arith.addf %12, %13 : vector<8x256xf32>
    %15 = vector.extract_strided_slice %14 {offsets = [0, 0], sizes = [8, 128], strides = [1, 1]} : vector<8x256xf32> to vector<8x128xf32>
    %16 = vector.extract_strided_slice %14 {offsets = [0, 128], sizes = [8, 128], strides = [1, 1]} : vector<8x256xf32> to vector<8x128xf32>
    %17 = arith.addf %15, %16 : vector<8x128xf32>
    %c0_5 = arith.constant 0 : index
    %c0_6 = arith.constant 0 : index
    %c0_7 = arith.constant 0 : index
    %18 = vector.load %arg4[%c0_5, %c0_6, %c0_7] : memref<1x8x128xf32, #tpu.memory_space<vmem>>, vector<1x8x128xf32>
    %19 = vector.shape_cast %17 : vector<8x128xf32> to vector<1x8x128xf32>
    %20 = arith.addf %18, %19 : vector<1x8x128xf32>
    %c0_8 = arith.constant 0 : index
    %c0_9 = arith.constant 0 : index
    %c0_10 = arith.constant 0 : index
    %21 = vector.load %arg4[%c0_8, %c0_9, %c0_10] : memref<1x8x128xf32, #tpu.memory_space<vmem>>, vector<1x8x128xf32>
    tpu.vector_store %arg4[%c0_8, %c0_9, %c0_10], %20 {strides = array<i32>} : memref<1x8x128xf32, #tpu.memory_space<vmem>>, vector<1x8x128xf32>,
    return
  }
  func.func @transform_0(%arg0: i32, %arg1: i32) -> (i32, i32) {
    %c1_i32 = arith.constant 1 : i32
    %0 = arith.muli %arg0, %c1_i32 : i32
    %1 = arith.addi %0, %arg1 : i32
    %c0_i32 = arith.constant 0 : i32
    %c0_i32_0 = arith.constant 0 : i32
    return %c0_i32, %1 : i32, i32
  }
  func.func @transform_1(%arg0: i32, %arg1: i32) -> (i32, i32) {
    %c1_i32 = arith.constant 1 : i32
    %0 = arith.muli %arg0, %c1_i32 : i32
    %1 = arith.addi %0, %arg1 : i32
    %c0_i32 = arith.constant 0 : i32
    %c0_i32_0 = arith.constant 0 : i32
    return %c0_i32, %1 : i32, i32
  }
  func.func @transform_2(%arg0: i32, %arg1: i32) -> (i32, i32, i32) {
    %c0_i32 = arith.constant 0 : i32
    %c0_i32_0 = arith.constant 0 : i32
    %c0_i32_1 = arith.constant 0 : i32
    return %arg0, %c0_i32, %c0_i32_0 : i32, i32, i32
  }
}

</mosaic_0001>

<llo_original>
// kernel: tpu_custom_call.1
$region0: #{tpu_custom_call.1}
  #allocation0 [shape = 'u32[]', space=smem, size = 0x4, offset = 0x4, fixed_abs, tag = 'smem constant byte address 0x4 - core index']
  #allocation1 [shape = 'u32[144,128]{1,0:T(1,128)}', space=vmem, size = 0x12000, scoped, tag = 'internal scratch']
  %s0 = inlined_call_operand.hbm [shape: f32[8,256], index: 0, kind: input, shape index: {}]
  %s1 = inlined_call_operand.hbm [shape: f32[8,256], index: 1, kind: input, shape index: {}]
  %s2 = inlined_call_operand.hbm [shape: f32[1,8,128], index: 2, kind: output, shape index: {}]
  %s3 = sld [smem:[#allocation0]]
  $region30: #{tpu_custom_call.1} parent=0
    _
  %s5 = ssub.s32 1, %s3
  %s6 = scalar_select 0, %s5, %s3
  $region1: #{tpu_custom_call.1} parent=0
    #allocation2 [shape = 'u8[8192]{0}', space=vmem, size = 0x2000, scoped, tag = 'input window, operand 0, single buffered']
    #allocation3 [shape = 's32[1]{0}', space=sflag, size = 0x4, scoped, tag = 'scoped memory for tpu_custom_call.1']
    #allocation4 [shape = 's32[1]{0}', space=sflag, size = 0x4, scoped, tag = 'scoped memory for tpu_custom_call.1']
    #allocation5 [shape = 'u8[8192]{0}', space=vmem, size = 0x2000, scoped, tag = 'input window, operand 1, single buffered']
    #allocation6 [shape = 's32[1]{0}', space=sflag, size = 0x4, scoped, tag = 'scoped memory for tpu_custom_call.1']
    #allocation7 [shape = 'u8[4096]{0}', space=vmem, size = 0x1000, scoped, tag = 'output window, operand 0, single buffered']
    %7 = vsyncpa [#allocation3], 0
    %8 = vsyncpa [#allocation6], 0
    %9 = vsyncpa [#allocation4], 0
    // Predicated region
    $region2: #{tpu_custom_call.1} parent=1 // pred_check
      _
    $region3: #{tpu_custom_call.1} parent=1 // pred_check_branch
      %11 = sbr.rel (0) target = $region5
    $region4: #{tpu_custom_call.1} parent=1 // pred_region
      %s12 = sadd.s32 0, 0
      %s13 = smul.u32 2, %s12
      %s15 = ssub.s32 256, 256
      %16 = vsyncadd [#allocation3], %s15
      %s17 = smul.addr %s13, 128
      %s18 = scalar_lea.hbm %s0, %s17
      %s20 = sshll.u32 [#allocation2], 4
      %s21 = int_to_ptr.vmem [resolvable:$true] %s20
      %23 = dma.hbm_to_vmem [thread:$0]  %s18, 256, %s21, [#allocation3]
    $region5: #{tpu_custom_call.1} parent=1 // pred_fallthru
      _
    // Predicated region
    $region6: #{tpu_custom_call.1} parent=1 // pred_check
      _
    $region7: #{tpu_custom_call.1} parent=1 // pred_check_branch
      %25 = sbr.rel (0) target = $region9
    $region8: #{tpu_custom_call.1} parent=1 // pred_region
      %s26 = sadd.s32 0, 0
      %s27 = smul.u32 2, %s26
      %s29 = ssub.s32 256, 256
      %30 = vsyncadd [#allocation6], %s29
      %s31 = smul.addr %s27, 128
      %s32 = scalar_lea.hbm %s1, %s31
      %s34 = sshll.u32 [#allocation5], 4
      %s35 = int_to_ptr.vmem [resolvable:$true] %s34
      %37 = dma.hbm_to_vmem [thread:$0]  %s32, 256, %s35, [#allocation6]
    $region9: #{tpu_custom_call.1} parent=1 // pred_fallthru
      _
    // Predicated region
    $region10: #{tpu_custom_call.1} parent=1 // pred_check
      _
    $region11: #{tpu_custom_call.1} parent=1 // pred_check_branch
      %39 = sbr.rel (0) target = $region13
    $region12: #{tpu_custom_call.1} parent=1 // pred_region
      %40 = dma.done [#allocation3], 256
    $region13: #{tpu_custom_call.1} parent=1 // pred_fallthru
      _
    // Predicated region
    $region14: #{tpu_custom_call.1} parent=1 // pred_check
      _
    $region15: #{tpu_custom_call.1} parent=1 // pred_check_branch
      %42 = sbr.rel (0) target = $region17
    $region16: #{tpu_custom_call.1} parent=1 // pred_region
      %43 = dma.done [#allocation6], 256
    $region17: #{tpu_custom_call.1} parent=1 // pred_fallthru
      _
    %s44 = sadd.s32 0, 0
    %s45 = smul.u32 2, %s44
    %s46 = sadd.s32 0, 0
    %s47 = smul.u32 2, %s46
    %p48 = scmp.eq.s32.totalorder 0, 0
    // Predicated region
    $region18: #{tpu_custom_call.1} parent=1 // pred_check
      %p49 = pneg %p48
    $region19: #{tpu_custom_call.1} parent=1 // pred_check_branch
      %51 = sbr.rel (%p49) target = $region21
    $region20: #{tpu_custom_call.1} parent=1 // pred_region
      %52 = vst [vmem:[#allocation7] sm:$0xff] 0.0
    $region21: #{tpu_custom_call.1} parent=1 // pred_fallthru
      _
    %v53 = vld [vmem:[#allocation2] sm:$0xff]
    %v54 = vld [vmem:[#allocation2 + $0x8] sm:$0xff]
    %v55 = vld [vmem:[#allocation5] sm:$0xff]
    %v56 = vld [vmem:[#allocation5 + $0x8] sm:$0xff]
    %v57 = vand.u32 2147483647, %v53
    %v58 = vand.u32 2147483647, %v54
    %v59 = vsub.f32 0.0, %v57
    %v60 = vsub.f32 0.0, %v58
    %v61 = vmul.f32 %v59, 1.442695
    %v62 = vpow.pop %v61
    %v63 = vmul.f32 %v60, 1.442695
    %v64 = vpow.pop %v63
    %v65 = vmax.f32 %v53, 0.0
    %v66 = vmax.f32 %v54, 0.0
    %v67 = vmul.f32 %v53, %v55
    %v68 = vmul.f32 %v54, %v56
    %v69 = vsub.f32 %v65, %v67
    %v70 = vsub.f32 %v66, %v68
    %v71 = vadd.f32 %v62, 1.0
    %v72 = vlog2.pop %v71
    %v73 = vmul.f32 %v72, 0.6931472
    %v74 = vmul.f32 -0.5, %v62
    %v75 = vadd.f32 %v74, 1.0
    %v76 = vmul.f32 %v75, %v62
    %v77 = vand.u32 2147483647, %v62
    %vm78 = vcmp.lt.f32.partialorder %v77, 0.0004427343
    %v79 = vsel %vm78, %v76, %v73
    %v80 = vadd.f32 %v64, 1.0
    %v81 = vlog2.pop %v80
    %v82 = vmul.f32 %v81, 0.6931472
    %v83 = vmul.f32 -0.5, %v64
    %v84 = vadd.f32 %v83, 1.0
    %v85 = vmul.f32 %v84, %v64
    %v86 = vand.u32 2147483647, %v64
    %vm87 = vcmp.lt.f32.partialorder %v86, 0.0004427343
    %v88 = vsel %vm87, %v85, %v82
    %v89 = vadd.f32 %v69, %v79
    %v90 = vadd.f32 %v70, %v88
    %v91 = vadd.f32 %v89, %v90
    %v92 = vld [vmem:[#allocation7] sm:$0xff]
    %v93 = vadd.f32 %v92, %v91
    %94 = vst [vmem:[#allocation7] sm:$0xff] %v93
    // Predicated region
    $region22: #{tpu_custom_call.1} parent=1 // pred_check
      _
    $region23: #{tpu_custom_call.1} parent=1 // pred_check_branch
      %96 = sbr.rel (0) target = $region25
    $region24: #{tpu_custom_call.1} parent=1 // pred_region
      %s98 = ssub.s32 128, 128
      %99 = vsyncadd [#allocation4], %s98
      %s101 = sshll.u32 [#allocation7], 4
      %s102 = int_to_ptr.vmem [resolvable:$true] %s101
      %104 = dma.vmem_to_hbm [thread:$0]  %s102, 128, %s2, [#allocation4]
    $region25: #{tpu_custom_call.1} parent=1 // pred_fallthru
      _
    // Predicated region
    $region26: #{tpu_custom_call.1} parent=1 // pred_check
      _
    $region27: #{tpu_custom_call.1} parent=1 // pred_check_branch
      %106 = sbr.rel (0) target = $region29
    $region28: #{tpu_custom_call.1} parent=1 // pred_region
      %107 = dma.done [#allocation4], 128
    $region29: #{tpu_custom_call.1} parent=1 // pred_fallthru
      _
    %108 = vsyncpa [#allocation3], 1
    %109 = vsyncpa [#allocation6], 1
    %110 = vsyncpa [#allocation4], 1

</llo_original>
